<compile_context>
chip_gen: v7x
topology: tpu7x:2x2x1
jax: 0.10.0
libtpu: 0.0.40
codegen_flags: <defaults>
</compile_context>

<pallas_src>
import jax
import jax.numpy as jnp
from jax import lax
from jax.experimental import pallas as pl
from jax.experimental.pallas import tpu as pltpu


DEFAULT_COMPUTE_DTYPE = jnp.bfloat16


def _pick_tile(dim, target):
    """Largest legal tile <= target that evenly divides dim (falls back to full dim).

    Targets are multiples of (8, 128), so the result is always (8,128)-legal:
    either the full dim or a 128/8-aligned divisor."""
    if dim <= target:
        return dim
    if dim % target == 0:
        return target
    return dim


# ----------------------------------------------------------------------------
# Kernel 1: stacked dense projection  y[p] = x @ Wt[p] + b[p]
#   Wt is the pre-transposed torch weight ([K, N]); P = 3 for fused QKV, 1 for out.
# ----------------------------------------------------------------------------
def _stacked_linear_kernel(x_ref, w_ref, b_ref, o_ref, acc_ref):
    @pl.when(pl.program_id(3) == 0)
    def _init():
        acc_ref[...] = jnp.zeros_like(acc_ref)

    acc_ref[...] += jnp.dot(x_ref[...], w_ref[0],
                            preferred_element_type=jnp.float32)

    @pl.when(pl.program_id(3) == pl.num_programs(3) - 1)
    def _finalize():
        o_ref[0] = (acc_ref[...] + b_ref[0].astype(jnp.float32)).astype(o_ref.dtype)


def stacked_linear(x, w_t, b, out_dtype, *, tm=256, tn=256, tk=512):
    """x: [M, K]; w_t: [P, K, N] (pre-transposed); b: [P, 1, N] -> [P, M, N]."""
    M, K = x.shape
    P, _, N = w_t.shape
    tm = _pick_tile(M, tm)
    tn = _pick_tile(N, tn)
    tk = _pick_tile(K, tk)
    grid = (P, M // tm, N // tn, K // tk)
    cost = pl.CostEstimate(
        flops=2 * P * M * N * K,
        transcendentals=0,
        bytes_accessed=int(x.size * x.dtype.itemsize
                           + w_t.size * w_t.dtype.itemsize
                           + b.size * 4
                           + P * M * N * jnp.dtype(out_dtype).itemsize),
    )
    return pl.pallas_call(
        _stacked_linear_kernel,
        out_shape=jax.ShapeDtypeStruct((P, M, N), out_dtype),
        grid_spec=pltpu.PrefetchScalarGridSpec(
            num_scalar_prefetch=0,
            grid=grid,
            in_specs=[
                pl.BlockSpec((tm, tk), lambda p, i, j, k: (i, k)),
                pl.BlockSpec((1, tk, tn), lambda p, i, j, k: (p, k, j)),
                pl.BlockSpec((1, 1, tn), lambda p, i, j, k: (p, 0, j)),
            ],
            out_specs=pl.BlockSpec((1, tm, tn), lambda p, i, j, k: (p, i, j)),
            scratch_shapes=[pltpu.VMEM((tm, tn), jnp.float32)],
        ),
        compiler_params=pltpu.CompilerParams(
            dimension_semantics=("parallel", "parallel", "parallel", "arbitrary")),
        cost_estimate=cost,
    )(x, w_t, b)


# ----------------------------------------------------------------------------
# Kernel 2a: flash-style attention (KV-tiled online softmax), no attn_weights out.
#   Heads are split inside the kernel via lane slices of the packed E dimension.
# ----------------------------------------------------------------------------
def _make_flash_attn_kernel(num_heads, head_dim, has_mask, compute_dtype):
    H, D = num_heads, head_dim

    def kernel(hscale_ref, *refs):
        if has_mask:
            q_ref, k_ref, v_ref, mask_ref, o_ref, m_sc, l_sc, acc_sc = refs
        else:
            q_ref, k_ref, v_ref, o_ref, m_sc, l_sc, acc_sc = refs
            mask_ref = None

        kv = pl.program_id(2)

        @pl.when(kv == 0)
        def _init():
            m_sc[...] = jnp.full_like(m_sc, -jnp.inf)
            l_sc[...] = jnp.zeros_like(l_sc)
            acc_sc[...] = jnp.zeros_like(acc_sc)

        for h in range(H):
            sl = slice(h * D, (h + 1) * D)
            qh = q_ref[0, 0, :, sl]                 # [tq, D]  (compute dtype)
            kh = k_ref[0, 0, :, sl]                 # [tk, D]
            vh = v_ref[0, 0, :, sl]                 # [tk, D]
            s = lax.dot_general(qh, kh, (((1,), (1,)), ((), ())),
                                preferred_element_type=jnp.float32)  # [tq, tk]
            if has_mask:
                s = s + mask_ref[0].astype(jnp.float32)
            m_prev = m_sc[h]                        # [tq, 1]
            m_new = jnp.maximum(m_prev, jnp.max(s, axis=-1, keepdims=True))
            alpha = jnp.exp(m_prev - m_new)
            p = jnp.exp(s - m_new)
            l_sc[h] = alpha * l_sc[h] + jnp.sum(p, axis=-1, keepdims=True)
            acc_sc[h] = alpha * acc_sc[h] + jnp.dot(
                p.astype(compute_dtype), vh, preferred_element_type=jnp.float32)
            m_sc[h] = m_new
            # dropout p=0.0 -> identity (module default).

        @pl.when(kv == pl.num_programs(2) - 1)
        def _finalize():
            cols = []
            for h in range(H):
                inv = pl.reciprocal(l_sc[h], approx=True)
                # layer_head_mask applied to the output (== applying it to probs).
                cols.append(acc_sc[h] * (inv * hscale_ref[h]))
            o_ref[0] = jnp.concatenate(cols, axis=-1).astype(o_ref.dtype)

    return kernel


def _flash_attention(qkv, mask, hscale, num_heads, head_dim, out_dtype,
                     *, tq=256, tkv=512):
    _, B, T, E = qkv.shape
    S = T  # self-attention
    H, D = num_heads, head_dim
    tq = _pick_tile(T, tq)
    tkv = _pick_tile(S, tkv)
    grid = (B, T // tq, S // tkv)
    has_mask = mask is not None
    kernel = _make_flash_attn_kernel(H, D, has_mask, qkv.dtype)

    in_specs = [
        pl.BlockSpec((1, 1, tq, E), lambda b, t, s_, *_: (0, b, t, 0)),
        pl.BlockSpec((1, 1, tkv, E), lambda b, t, s_, *_: (1, b, s_, 0)),
        pl.BlockSpec((1, 1, tkv, E), lambda b, t, s_, *_: (2, b, s_, 0)),
    ]
    args = [qkv, qkv, qkv]
    if has_mask:
        in_specs.append(pl.BlockSpec((1, tq, tkv), lambda b, t, s_, *_: (b, t, s_)))
        args.append(mask)

    n_t = T // tq
    itm = qkv.dtype.itemsize
    cost = pl.CostEstimate(
        flops=4 * B * H * T * S * D,
        transcendentals=B * H * T * S,
        bytes_accessed=int(B * T * E * itm            # q
                           + 2 * n_t * B * S * E * itm  # k, v (revisited per q tile)
                           + (B * T * S * 4 if has_mask else 0)
                           + B * T * E * jnp.dtype(out_dtype).itemsize),
    )

    return pl.pallas_call(
        kernel,
        out_shape=jax.ShapeDtypeStruct((B, T, E), out_dtype),
        grid_spec=pltpu.PrefetchScalarGridSpec(
            num_scalar_prefetch=1,          # hscale -> SMEM
            grid=grid,
            in_specs=in_specs,
            out_specs=pl.BlockSpec((1, tq, E), lambda b, t, s_, *_: (b, t, 0)),
            scratch_shapes=[
                pltpu.VMEM((H, tq, 1), jnp.float32),   # running max
                pltpu.VMEM((H, tq, 1), jnp.float32),   # running sum
                pltpu.VMEM((H, tq, D), jnp.float32),   # output accumulator
            ],
        ),
        compiler_params=pltpu.CompilerParams(
            dimension_semantics=("parallel", "parallel", "arbitrary")),
        cost_estimate=cost,
    )(hscale, *args)


# ----------------------------------------------------------------------------
# Kernel 2b: attention with attn_weights writeback (output_attentions=True path).
#   Full-S softmax per head; probs (post head-mask) are stored, matching torch.
# ----------------------------------------------------------------------------
def _make_attn_weights_kernel(num_heads, head_dim, has_mask, compute_dtype):
    H, D = num_heads, head_dim

    def kernel(hscale_ref, *refs):
        if has_mask:
            q_ref, k_ref, v_ref, mask_ref, o_ref, w_ref = refs
        else:
            q_ref, k_ref, v_ref, o_ref, w_ref = refs
            mask_ref = None

        cols = []
        for h in range(H):
            sl = slice(h * D, (h + 1) * D)
            qh = q_ref[0, 0, :, sl]
            kh = k_ref[0, 0, :, sl]
            vh = v_ref[0, 0, :, sl]
            s = lax.dot_general(qh, kh, (((1,), (1,)), ((), ())),
                                preferred_element_type=jnp.float32)  # [tq, S]
            if has_mask:
                s = s + mask_ref[0].astype(jnp.float32)
            m = jnp.max(s, axis=-1, keepdims=True)
            e = jnp.exp(s - m)
            p = e * pl.reciprocal(jnp.sum(e, axis=-1, keepdims=True), approx=True)
            p = p * hscale_ref[h]                 # layer_head_mask (1.0 if unused)
            w_ref[0, h] = p.astype(w_ref.dtype)   # attn_weights (post head-mask)
            # dropout p=0.0 -> identity.
            cols.append(jnp.dot(p.astype(compute_dtype), vh,
                                preferred_element_type=jnp.float32))
        o_ref[0] = jnp.concatenate(cols, axis=-1).astype(o_ref.dtype)

    return kernel


def _attention_with_weights(qkv, mask, hscale, num_heads, head_dim, out_dtype,
                            *, tq=256):
    _, B, T, E = qkv.shape
    S = T
    H, D = num_heads, head_dim
    tq = _pick_tile(T, tq)
    grid = (B, T // tq)
    has_mask = mask is not None
    kernel = _make_attn_weights_kernel(H, D, has_mask, qkv.dtype)

    in_specs = [
        pl.BlockSpec((1, 1, tq, E), lambda b, t, *_: (0, b, t, 0)),
        pl.BlockSpec((1, 1, S, E), lambda b, t, *_: (1, b, 0, 0)),
        pl.BlockSpec((1, 1, S, E), lambda b, t, *_: (2, b, 0, 0)),
    ]
    args = [qkv, qkv, qkv]
    if has_mask:
        in_specs.append(pl.BlockSpec((1, tq, S), lambda b, t, *_: (b, t, 0)))
        args.append(mask)

    out_shape = (jax.ShapeDtypeStruct((B, T, E), out_dtype),
                 jax.ShapeDtypeStruct((B, H, T, S), jnp.float32))
    out_specs = (pl.BlockSpec((1, tq, E), lambda b, t, *_: (b, t, 0)),
                 pl.BlockSpec((1, H, tq, S), lambda b, t, *_: (b, 0, t, 0)))

    return pl.pallas_call(
        kernel,
        out_shape=out_shape,
        grid_spec=pltpu.PrefetchScalarGridSpec(
            num_scalar_prefetch=1,
            grid=grid,
            in_specs=in_specs,
            out_specs=out_specs,
        ),
        compiler_params=pltpu.CompilerParams(
            dimension_semantics=("parallel", "parallel"),
            vmem_limit_bytes=64 * 1024 * 1024),
    )(hscale, *args)


# ----------------------------------------------------------------------------
# Parameter prep (one-time): fuse + pre-transpose weights, fold query scaling,
# cast matmul weights to the compute dtype.
# ----------------------------------------------------------------------------
def prepare_params(params, num_heads, compute_dtype=DEFAULT_COMPUTE_DTYPE):
    E = params["q_w"].shape[0]
    D = E // num_heads
    scaling = float(D) ** -0.5
    qkv_w = jnp.stack([
        (params["q_w"] * scaling).T,   # fold 1/sqrt(head_dim) into the weights
        params["k_w"].T,
        params["v_w"].T,
    ]).astype(compute_dtype)                                   # [3, E, E]
    qkv_b = jnp.stack([
        params["q_b"] * scaling,
        params["k_b"],
        params["v_b"],
    ]).reshape(3, 1, E).astype(jnp.float32)                    # [3, 1, E]
    return {
        "qkv_w": qkv_w,
        "qkv_b": qkv_b,
        "o_w": params["o_w"].T[None].astype(compute_dtype),    # [1, E, E]
        "o_b": params["o_b"].reshape(1, 1, E).astype(jnp.float32),
    }


# ----------------------------------------------------------------------------
# Full forward (self-attention path: key_value_states=None, past_key_value=None)
# ----------------------------------------------------------------------------
def bart_attention_forward(hidden_states, prepared, num_heads,
                           attention_mask=None, layer_head_mask=None,
                           output_attentions=False,
                           compute_dtype=DEFAULT_COMPUTE_DTYPE):
    B, T, E = hidden_states.shape
    H = num_heads
    D = E // H
    out_dtype = hidden_states.dtype

    x = hidden_states.reshape(B * T, E).astype(compute_dtype)

    # Fused Q/K/V projection: one tiled, pipelined matmul over the stacked weight.
    qkv = stacked_linear(x, prepared["qkv_w"], prepared["qkv_b"], compute_dtype)
    qkv = qkv.reshape(3, B, T, E)   # free reshape; heads stay packed along E.

    if attention_mask is not None:
        # torch contract: (B, 1, T, S) additive mask -> keep as [B, T, S] (no H bcast)
        mask = attention_mask.reshape(B, T, attention_mask.shape[-1]).astype(jnp.float32)
    else:
        mask = None

    if layer_head_mask is not None:
        hscale = layer_head_mask.reshape(H).astype(jnp.float32)
    else:
        hscale = jnp.ones((H,), jnp.float32)

    if output_attentions:
        attn_out, attn_w = _attention_with_weights(
            qkv, mask, hscale, H, D, compute_dtype)
    else:
        attn_out = _flash_attention(qkv, mask, hscale, H, D, compute_dtype)
        attn_w = None

    out = stacked_linear(attn_out.reshape(B * T, E), prepared["o_w"],
                         prepared["o_b"], out_dtype)
    out = out.reshape(B, T, E)

    past_key_value = None  # is_decoder=False path
    return out, attn_w, past_key_value


# ----------------------------------------------------------------------------
# Pure-JAX reference for validation
# ----------------------------------------------------------------------------
def reference_forward(hidden_states, params, num_heads,
                      attention_mask=None, layer_head_mask=None):
    B, T, E = hidden_states.shape
    H = num_heads
    D = E // H
    scaling = D ** (-0.5)

    def lin(x, w, b):
        return x @ w.T + b

    q = lin(hidden_states, params["q_w"], params["q_b"]) * scaling
    k = lin(hidden_states, params["k_w"], params["k_b"])
    v = lin(hidden_states, params["v_w"], params["v_b"])

    def sh(t):
        return t.reshape(B, T, H, D).transpose(0, 2, 1, 3)

    q, k, v = sh(q), sh(k), sh(v)
    scores = jnp.einsum("bhtd,bhsd->bhts", q, k)
    if attention_mask is not None:
        scores = scores + attention_mask
    probs = jax.nn.softmax(scores, axis=-1)
    if layer_head_mask is not None:
        probs = probs * layer_head_mask.reshape(1, H, 1, 1)
    out = jnp.einsum("bhts,bhsd->bhtd", probs, v)
    out = out.transpose(0, 2, 1, 3).reshape(B, T, E)
    return lin(out, params["o_w"], params["o_b"]), probs


if __name__ == "__main__":
    B, T, E, H = 2, 8, 32, 4

    key = jax.random.PRNGKey(0)
    keys = jax.random.split(key, 10)
    init = lambda k, shape: (0.02 * jax.random.normal(k, shape)).astype(jnp.float32)
    params = {
        "q_w": init(keys[0], (E, E)), "q_b": init(keys[1], (E,)),
        "k_w": init(keys[2], (E, E)), "k_b": init(keys[3], (E,)),
        "v_w": init(keys[4], (E, E)), "v_b": init(keys[5], (E,)),
        "o_w": init(keys[6], (E, E)), "o_b": init(keys[7], (E,)),
    }
    prepared = prepare_params(params, H)

    hidden = jax.random.normal(keys[8], (B, T, E), dtype=jnp.float32)
    # causal additive mask, shape (B, 1, T, T) as in BART
    causal = jnp.where(
        jnp.arange(T)[:, None] >= jnp.arange(T)[None, :], 0.0, -1e9
    ).astype(jnp.float32)
    attention_mask = jnp.broadcast_to(causal, (B, 1, T, T))
    layer_head_mask = jnp.linspace(0.5, 1.0, H, dtype=jnp.float32)

    # Reference results.
    ref_out, ref_w = reference_forward(
        hidden, params, H,
        attention_mask=attention_mask, layer_head_mask=layer_head_mask)
    ref_out_nomask, _ = reference_forward(hidden, params, H)

    # Path 1: mask + head mask, attention weights requested (full-softmax variant).
    out1, attn_w1, _ = bart_attention_forward(
        hidden, prepared, H,
        attention_mask=attention_mask, layer_head_mask=layer_head_mask,
        output_attentions=True)
    out1 = jax.block_until_ready(out1)
    attn_w1 = jax.block_until_ready(attn_w1)
    assert out1.shape == (B, T, E)
    assert attn_w1.shape == (B, H, T, T)
    assert jnp.allclose(out1, ref_out, atol=5e-2, rtol=5e-2)
    assert jnp.allclose(attn_w1, ref_w, atol=5e-2, rtol=5e-2)

    # Path 2: flash (KV-tiled) attention, no attn_weights writeback.
    out2, attn_w2, _ = bart_attention_forward(
        hidden, prepared, H,
        attention_mask=attention_mask, layer_head_mask=layer_head_mask,
        output_attentions=False)
    out2 = jax.block_until_ready(out2)
    assert attn_w2 is None
    assert jnp.allclose(out2, ref_out, atol=5e-2, rtol=5e-2)

    # Path 3: no mask / no head mask (specialized kernels, no dummy tensors).
    out3, _, _ = bart_attention_forward(hidden, prepared, H,
                                        output_attentions=False)
    out3 = jax.block_until_ready(out3)
    assert jnp.allclose(out3, ref_out_nomask, atol=5e-2, rtol=5e-2)

    print("KERNEL_OK")
</pallas_src>

<mosaic_0001>
module attributes {stable_mosaic.version = 11 : i64} {
  func.func @_stacked_linear_kernel(%arg0: i32, %arg1: i32, %arg2: i32, %arg3: i32, %arg4: memref<16x32xbf16, #tpu.memory_space<vmem>>, %arg5: memref<1x32x32xbf16, #tpu.memory_space<vmem>>, %arg6: memref<1x1x32xf32, #tpu.memory_space<vmem>>, %arg7: memref<1x16x32xbf16, #tpu.memory_space<vmem>>, %arg8: memref<16x32xf32, #tpu.memory_space<vmem>>) attributes {dimension_semantics = [#tpu.dimension_semantics<parallel>, #tpu.dimension_semantics<parallel>, #tpu.dimension_semantics<parallel>, #tpu.dimension_semantics<arbitrary>], iteration_bounds = array<i64: 3, 1, 1, 1>, scalar_prefetch = 0 : i64, scratch_operands = 1 : i64, tpu.core_type = #tpu.core_type<tc>, window_params = [{transform_indices = @transform_0, window_bounds = array<i64: 16, 32>}, {transform_indices = @transform_1, window_bounds = array<i64: 1, 32, 32>}, {transform_indices = @transform_2, window_bounds = array<i64: 1, 1, 32>}, {transform_indices = @transform_3, window_bounds = array<i64: 1, 16, 32>}]} {
    %c0_i32 = arith.constant 0 : i32
    %0 = arith.cmpi eq, %arg3, %c0_i32 : i32
    %1 = arith.extui %0 : i1 to i32
    %c0_i32_0 = arith.constant 0 : i32
    %2 = arith.cmpi ne, %1, %c0_i32_0 : i32
    scf.if %2 {
      %cst_11 = arith.constant 0.000000e+00 : f32
      %13 = vector.broadcast %cst_11 : f32 to vector<16x32xf32>
      %c0_12 = arith.constant 0 : index
      %c0_13 = arith.constant 0 : index
      %14 = vector.load %arg8[%c0_12, %c0_13] : memref<16x32xf32, #tpu.memory_space<vmem>>, vector<16x32xf32>
      tpu.vector_store %arg8[%c0_12, %c0_13], %13 {strides = array<i32>} : memref<16x32xf32, #tpu.memory_space<vmem>>, vector<16x32xf32>,
    } else {
    }
    %c0 = arith.constant 0 : index
    %c0_1 = arith.constant 0 : index
    %3 = vector.load %arg8[%c0, %c0_1] : memref<16x32xf32, #tpu.memory_space<vmem>>, vector<16x32xf32>
    %c0_2 = arith.constant 0 : index
    %c0_3 = arith.constant 0 : index
    %4 = vector.load %arg4[%c0_2, %c0_3] : memref<16x32xbf16, #tpu.memory_space<vmem>>, vector<16x32xbf16>
    %c0_4 = arith.constant 0 : index
    %c0_5 = arith.constant 0 : index
    %c0_6 = arith.constant 0 : index
    %5 = vector.load %arg5[%c0_4, %c0_5, %c0_6] : memref<1x32x32xbf16, #tpu.memory_space<vmem>>, vector<1x32x32xbf16>
    %6 = vector.shape_cast %5 : vector<1x32x32xbf16> to vector<32x32xbf16>
    %cst = arith.constant dense<0.000000e+00> : vector<16x32xf32>
    %7 = tpu.matmul %4, %6, %cst {dimension_numbers = #tpu.dot_dimension_numbers<[1], [0], [0], [1], [0, 0, 1, 1], [], []>} : vector<16x32xbf16>, vector<32x32xbf16>, vector<16x32xf32> -> vector<16x32xf32>
    %8 = arith.addf %3, %7 : vector<16x32xf32>
    %c0_7 = arith.constant 0 : index
    %c0_8 = arith.constant 0 : index
    %9 = vector.load %arg8[%c0_7, %c0_8] : memref<16x32xf32, #tpu.memory_space<vmem>>, vector<16x32xf32>
    tpu.vector_store %arg8[%c0_7, %c0_8], %8 {strides = array<i32>} : memref<16x32xf32, #tpu.memory_space<vmem>>, vector<16x32xf32>,
    %c0_i32_9 = arith.constant 0 : i32
    %10 = arith.cmpi eq, %arg3, %c0_i32_9 : i32
    %11 = arith.extui %10 : i1 to i32
    %c0_i32_10 = arith.constant 0 : i32
    %12 = arith.cmpi ne, %11, %c0_i32_10 : i32
    scf.if %12 {
      %c0_11 = arith.constant 0 : index
      %c0_12 = arith.constant 0 : index
      %13 = vector.load %arg8[%c0_11, %c0_12] : memref<16x32xf32, #tpu.memory_space<vmem>>, vector<16x32xf32>
      %c0_13 = arith.constant 0 : index
      %c0_14 = arith.constant 0 : index
      %c0_15 = arith.constant 0 : index
      %14 = vector.load %arg6[%c0_13, %c0_14, %c0_15] : memref<1x1x32xf32, #tpu.memory_space<vmem>>, vector<1x1x32xf32>
      %15 = vector.shape_cast %14 : vector<1x1x32xf32> to vector<1x32xf32>
      %16 = vector.broadcast %15 : vector<1x32xf32> to vector<16x32xf32>
      %17 = arith.addf %13, %16 : vector<16x32xf32>
      %18 = arith.truncf %17 : vector<16x32xf32> to vector<16x32xbf16>
      %c0_16 = arith.constant 0 : index
      %c0_17 = arith.constant 0 : index
      %c0_18 = arith.constant 0 : index
      %19 = vector.load %arg7[%c0_16, %c0_17, %c0_18] : memref<1x16x32xbf16, #tpu.memory_space<vmem>>, vector<1x16x32xbf16>
      %20 = vector.shape_cast %19 : vector<1x16x32xbf16> to vector<16x32xbf16>
      %21 = vector.shape_cast %18 : vector<16x32xbf16> to vector<1x16x32xbf16>
      tpu.vector_store %arg7[%c0_16, %c0_17, %c0_18], %21 {strides = array<i32>} : memref<1x16x32xbf16, #tpu.memory_space<vmem>>, vector<1x16x32xbf16>,
    } else {
    }
    return
  }
  func.func @transform_0(%arg0: i32, %arg1: i32, %arg2: i32, %arg3: i32) -> (i32, i32) {
    %c0_i32 = arith.constant 0 : i32
    return %arg1, %arg3 : i32, i32
  }
  func.func @transform_1(%arg0: i32, %arg1: i32, %arg2: i32, %arg3: i32) -> (i32, i32, i32) {
    %c0_i32 = arith.constant 0 : i32
    return %arg0, %arg3, %arg2 : i32, i32, i32
  }
  func.func @transform_2(%arg0: i32, %arg1: i32, %arg2: i32, %arg3: i32) -> (i32, i32, i32) {
    %c0_i32 = arith.constant 0 : i32
    %c0_i32_0 = arith.constant 0 : i32
    return %arg0, %c0_i32, %arg2 : i32, i32, i32
  }
  func.func @transform_3(%arg0: i32, %arg1: i32, %arg2: i32, %arg3: i32) -> (i32, i32, i32) {
    %c0_i32 = arith.constant 0 : i32
    return %arg0, %arg1, %arg2 : i32, i32, i32
  }
}

</mosaic_0001>

<llo_original>
// kernel: tpu_custom_call.1
$region0: #{tpu_custom_call.1}
  #allocation0 [shape = 'u32[]', space=smem, size = 0x4, offset = 0x4, fixed_abs, tag = 'smem constant byte address 0x4 - core index']
  #allocation1 [shape = 'u32[144,128]{1,0:T(1,128)}', space=vmem, size = 0x12000, scoped, tag = 'internal scratch']
  #allocation2 [shape = 'f32[16,32]{1,0:T(8,128)}', space=vmem, size = 0x2000, scoped, tag = 'scratch operand']
  %s0 = inlined_call_operand.hbm [shape: bf16[16,32], index: 0, kind: input, shape index: {}]
  %s1 = inlined_call_operand.hbm [shape: bf16[3,32,32], index: 1, kind: input, shape index: {}]
  %s2 = inlined_call_operand.vmem [shape: f32[3,1,32], index: 2, kind: input, shape index: {}]
  %s3 = inlined_call_operand.hbm [shape: bf16[3,16,32], index: 3, kind: output, shape index: {}]
  %s4 = sld [smem:[#allocation0]]
  $region61: #{tpu_custom_call.1} parent=0
    _
  %s6 = ssub.s32 1, %s4
  %s7 = scalar_select 0, %s6, %s4
  $region1: #{tpu_custom_call.1} parent=0
    #allocation3 [shape = 'u8[4096]{0}', space=vmem, size = 0x1000, scoped, tag = 'input window, operand 0, single buffered']
    #allocation4 [shape = 's32[2]{0}', space=sflag, size = 0x8, scoped, tag = 'scoped memory for tpu_custom_call.1']
    #allocation5 [shape = 's32[2]{0}', space=sflag, size = 0x8, scoped, tag = 'scoped memory for tpu_custom_call.1']
    #allocation6 [shape = 'u8[16384]{0}', space=vmem, size = 0x4000, scoped, tag = 'input window, operand 1']
    #allocation7 [shape = 's32[2]{0}', space=sflag, size = 0x8, scoped, tag = 'scoped memory for tpu_custom_call.1']
    #allocation8 [shape = 'u8[8192]{0}', space=vmem, size = 0x2000, scoped, tag = 'output window, operand 0']
    %8 = vsyncpa [#allocation4], 0
    %9 = vsyncpa [#allocation7], 0
    %s10 = scalar_lea.sflag [#allocation7], 1
    %11 = vsyncpa %s10, 0
    %12 = vsyncpa [#allocation5], 0
    %s13 = scalar_lea.sflag [#allocation5], 1
    %14 = vsyncpa %s13, 0
    loop: start=0, step=1, limit=5
    $region2: #{tpu_custom_call.1} parent=1 // loop_pre_header
      _
    $region3: #{tpu_custom_call.1} parent=1 // loop_header
      %s16 = sphi 0, %s20
      %p17 = scmp.ge.s32.totalorder %s16, 5
      %s23 = sphi 0, %s49
      %s24 = sphi 0, %s45
      %s25 = sphi 0, %s41
      %s26 = sphi 0, %s37
      %s27 = sphi 0, %s23
      %s28 = sphi 0, %s24
      %s29 = sphi 0, %s25
      %s30 = sphi 0, %s26
      %s31 = sphi 0, %s27
      %s32 = sphi 0, %s28
      %s33 = sphi 0, %s29
      %s34 = sphi 0, %s30
      %s54 = sphi 0, %s56
      %s57 = sphi 0, %s54
      %s58 = sphi 0, %s57
      %s74 = sphi 0, %s58
      %s84 = sphi 0, %s86
      %s87 = sphi 0, %s84
      %s88 = sphi 0, %s87
      %s104 = sphi 0, %s88
      %s112 = sphi 0, %s114
      %s115 = sphi 0, %s112
      %s116 = sphi 0, %s115
      %s132 = sphi 0, %s116
      %s142 = sphi 0, %s144
      %s145 = sphi 0, %s142
      %s146 = sphi 0, %s145
      %s162 = sphi 0, %s146
    $region4: #{tpu_custom_call.1} parent=1 // loop_header_branch
      %19 = sbr.rel (%p17) target = $region8
    $region5: #{tpu_custom_call.1} parent=1 // loop_body
      %s21 = ssub.s32 %s16, 1
      %s22 = ssub.s32 %s16, 2
      %s35 = sadd.s32 1, %s26
      %p36 = scmp.ge.s32.totalorder %s35, 1
      %s37 = scalar_select %p36, 0, %s35
      %s38 = sadd.s32 1, %s25
      %s39 = scalar_select %p36, %s38, %s25
      %p40 = scmp.ge.s32.totalorder %s39, 1
      %s41 = scalar_select %p40, 0, %s39
      %s42 = sadd.s32 1, %s24
      %s43 = scalar_select %p40, %s42, %s24
      %p44 = scmp.ge.s32.totalorder %s43, 1
      %s45 = scalar_select %p44, 0, %s43
      %s46 = sadd.s32 1, %s23
      %s47 = scalar_select %p44, %s46, %s23
      %p48 = scmp.ge.s32.totalorder %s47, 3
      %s49 = scalar_select %p48, 0, %s47
      %s50 = ssub.s32 %s24, %s45
      %s51 = ssub.s32 %s26, %s37
      %s52 = sor.u32 %s50, %s51
      %p53 = scmp.eq.s32.totalorder %s52, 0
      %s55 = sadd.s32 %s54, 1
      %s56 = scalar_select %p53, %s54, %s55
      %p59 = pneg %p53
      %p60 = scmp.eq.s32.totalorder %s16, 2
      %p61 = por %p59, %p60
      %p62 = scmp.ne.s32.totalorder %s54, %s57
      %p63 = scmp.eq.s32.totalorder %s16, 0
      %p64 = por %p62, %p63
      %p65 = scmp.ne.s32.totalorder %s54, %s57
      %p66 = scmp.eq.s32.totalorder %s21, 2
      %p67 = por %p65, %p66
      %p68 = scmp.ne.s32.totalorder %s57, %s58
      %p69 = scmp.eq.s32.totalorder %s21, 0
      %p70 = por %p68, %p69
      %p71 = scmp.ne.s32.totalorder %s57, %s58
      %p72 = scmp.eq.s32.totalorder %s22, 2
      %p73 = por %p71, %p72
      %p75 = scmp.ne.s32.totalorder %s58, %s74
      %p76 = scmp.eq.s32.totalorder %s22, 0
      %p77 = por %p75, %p76
      %s78 = ssub.s32 %s23, %s49
      %s79 = ssub.s32 %s26, %s37
      %s80 = sor.u32 %s78, %s79
      %s81 = ssub.s32 %s25, %s41
      %s82 = sor.u32 %s80, %s81
      %p83 = scmp.eq.s32.totalorder %s82, 0
      %s85 = sadd.s32 %s84, 1
      %s86 = scalar_select %p83, %s84, %s85
      %p89 = pneg %p83
      %p90 = scmp.eq.s32.totalorder %s16, 2
      %p91 = por %p89, %p90
      %p92 = scmp.ne.s32.totalorder %s84, %s87
      %p93 = scmp.eq.s32.totalorder %s16, 0
      %p94 = por %p92, %p93
      %p95 = scmp.ne.s32.totalorder %s84, %s87
      %p96 = scmp.eq.s32.totalorder %s21, 2
      %p97 = por %p95, %p96
      %p98 = scmp.ne.s32.totalorder %s87, %s88
      %p99 = scmp.eq.s32.totalorder %s21, 0
      %p100 = por %p98, %p99
      %p101 = scmp.ne.s32.totalorder %s87, %s88
      %p102 = scmp.eq.s32.totalorder %s22, 2
      %p103 = por %p101, %p102
      %p105 = scmp.ne.s32.totalorder %s88, %s104
      %p106 = scmp.eq.s32.totalorder %s22, 0
      %p107 = por %p105, %p106
      %s108 = ssub.s32 %s23, %s49
      %s109 = ssub.s32 %s25, %s41
      %s110 = sor.u32 %s108, %s109
      %p111 = scmp.eq.s32.totalorder %s110, 0
      %s113 = sadd.s32 %s112, 1
      %s114 = scalar_select %p111, %s112, %s113
      %p117 = pneg %p111
      %p118 = scmp.eq.s32.totalorder %s16, 2
      %p119 = por %p117, %p118
      %p120 = scmp.ne.s32.totalorder %s112, %s115
      %p121 = scmp.eq.s32.totalorder %s16, 0
      %p122 = por %p120, %p121
      %p123 = scmp.ne.s32.totalorder %s112, %s115
      %p124 = scmp.eq.s32.totalorder %s21, 2
      %p125 = por %p123, %p124
      %p126 = scmp.ne.s32.totalorder %s115, %s116
      %p127 = scmp.eq.s32.totalorder %s21, 0
      %p128 = por %p126, %p127
      %p129 = scmp.ne.s32.totalorder %s115, %s116
      %p130 = scmp.eq.s32.totalorder %s22, 2
      %p131 = por %p129, %p130
      %p133 = scmp.ne.s32.totalorder %s116, %s132
      %p134 = scmp.eq.s32.totalorder %s22, 0
      %p135 = por %p133, %p134
      %s136 = ssub.s32 %s23, %s49
      %s137 = ssub.s32 %s24, %s45
      %s138 = sor.u32 %s136, %s137
      %s139 = ssub.s32 %s25, %s41
      %s140 = sor.u32 %s138, %s139
      %p141 = scmp.eq.s32.totalorder %s140, 0
      %s143 = sadd.s32 %s142, 1
      %s144 = scalar_select %p141, %s142, %s143
      %p147 = pneg %p141
      %p148 = scmp.eq.s32.totalorder %s16, 2
      %p149 = por %p147, %p148
      %p150 = scmp.ne.s32.totalorder %s142, %s145
      %p151 = scmp.eq.s32.totalorder %s16, 0
      %p152 = por %p150, %p151
      %p153 = scmp.ne.s32.totalorder %s142, %s145
      %p154 = scmp.eq.s32.totalorder %s21, 2
      %p155 = por %p153, %p154
      %p156 = scmp.ne.s32.totalorder %s145, %s146
      %p157 = scmp.eq.s32.totalorder %s21, 0
      %p158 = por %p156, %p157
      %p159 = scmp.ne.s32.totalorder %s145, %s146
      %p160 = scmp.eq.s32.totalorder %s22, 2
      %p161 = por %p159, %p160
      %p163 = scmp.ne.s32.totalorder %s146, %s162
      %p164 = scmp.eq.s32.totalorder %s22, 0
      %p165 = por %p163, %p164
      %p166 = scmp.le.s32.totalorder 1, %s16
      %p167 = scmp.lt.s32.totalorder %s16, 4
      %p168 = pnand %p166, %p167
      %p169 = pneg %p168
      // Predicated region
      $region9: #{tpu_custom_call.1} parent=5 // pred_check
        _
      $region10: #{tpu_custom_call.1} parent=5 // pred_check_branch
        %171 = sbr.rel (%p168) target = $region12
      $region11: #{tpu_custom_call.1} parent=5 // pred_region
        %s172 = ssub.s32 %s16, 1
        // Predicated region
        $region13: #{tpu_custom_call.1} parent=11 // pred_check
          %p173 = pneg %p70
        $region14: #{tpu_custom_call.1} parent=11 // pred_check_branch
          %175 = sbr.rel (%p173) target = $region16
        $region15: #{tpu_custom_call.1} parent=11 // pred_region
          %s176 = smul.u32 2, %s28
          %s178 = ssub.s32 128, 128
          %179 = vsyncadd [#allocation4], %s178
          %s180 = sadd.s32 %s30, %s176
          %s181 = smul.addr %s180, 64
          %s182 = scalar_lea.hbm %s0, %s181
          %s183 = sshll.u32 [#allocation3], 4
          %s184 = int_to_ptr.vmem [resolvable:$true] %s183
          %189 = dma.hbm_to_vmem [thread:$0]  %s182, 128, %s184, [#allocation4], 64, 64, 4
        $region16: #{tpu_custom_call.1} parent=11 // pred_fallthru
          _
      $region12: #{tpu_custom_call.1} parent=5 // pred_fallthru
        _
      %p190 = scmp.lt.s32.totalorder %s16, 3
      // Predicated region
      $region17: #{tpu_custom_call.1} parent=5 // pred_check
        %p191 = pneg %p190
      $region18: #{tpu_custom_call.1} parent=5 // pred_check_branch
        %193 = sbr.rel (%p191) target = $region20
      $region19: #{tpu_custom_call.1} parent=5 // pred_region
        // Predicated region
        $region21: #{tpu_custom_call.1} parent=19 // pred_check
          %p194 = pneg %p94
        $region22: #{tpu_custom_call.1} parent=19 // pred_check_branch
          %196 = sbr.rel (%p194) target = $region24
        $region23: #{tpu_custom_call.1} parent=19 // pred_region
          %s197 = sand.u32 %s84, 1
          %s198 = scalar_lea.sflag [#allocation7], %s197
          %s199 = sand.u32 %s84, 1
          %s200 = smul.addr %s199, 16
          %s201 = scalar_lea.vmem [#allocation6], %s200
          %s202 = smul.u32 4, %s26
          %s204 = ssub.s32 256, 256
          %205 = vsyncadd %s198, %s204
          %s206 = sadd.s32 %s25, %s202
          %s207 = smul.addr %s23, 4
          %s208 = sadd.s32 %s206, %s207
          %s209 = smul.addr %s208, 64
          %s210 = scalar_lea.hbm %s1, %s209
          %s211 = sshll.u32 %s201, 4
          %s212 = int_to_ptr.vmem [resolvable:$true] %s211
          %217 = dma.hbm_to_vmem [thread:$0]  %s210, 256, %s212, %s198, 64, 64, 4
        $region24: #{tpu_custom_call.1} parent=19 // pred_fallthru
          _
        // Predicated region
        $region25: #{tpu_custom_call.1} parent=19 // pred_check
          %p218 = pneg %p122
        $region26: #{tpu_custom_call.1} parent=19 // pred_check_branch
          %220 = sbr.rel (%p218) target = $region28
        $region27: #{tpu_custom_call.1} parent=19 // pred_region
          %p221 = scmp.lt.s32.totalorder %s23, 2
          %s222 = scalar_select %p221, %s23, 2
          %p223 = scmp.lt.s32.totalorder %s25, 0
          %s224 = scalar_select %p223, %s25, 0
          %s225 = sadd.s32 %s224, %s222
          %s226 = scalar_lea.vmem %s2, %s225
        $region28: #{tpu_custom_call.1} parent=19 // pred_fallthru
          _
      $region20: #{tpu_custom_call.1} parent=5 // pred_fallthru
        _
      %p227 = scmp.le.s32.totalorder 1, %s16
      %p228 = scmp.lt.s32.totalorder %s16, 4
      %p229 = pnand %p227, %p228
      %p230 = pneg %p229
      // Predicated region
      $region29: #{tpu_custom_call.1} parent=5 // pred_check
        _
      $region30: #{tpu_custom_call.1} parent=5 // pred_check_branch
        %232 = sbr.rel (%p229) target = $region32
      $region31: #{tpu_custom_call.1} parent=5 // pred_region
        %s233 = ssub.s32 %s16, 1
        // Predicated region
        $region33: #{tpu_custom_call.1} parent=31 // pred_check
          %p234 = pneg %p70
        $region34: #{tpu_custom_call.1} parent=31 // pred_check_branch
          %236 = sbr.rel (%p234) target = $region36
        $region35: #{tpu_custom_call.1} parent=31 // pred_region
          %237 = dma.done [#allocation4], 128
        $region36: #{tpu_custom_call.1} parent=31 // pred_fallthru
          _
        %s238 = sand.u32 %s87, 1
        %s239 = scalar_lea.sflag [#allocation7], %s238
        %s240 = sand.u32 %s87, 1
        %s241 = smul.addr %s240, 16
        %s242 = scalar_lea.vmem [#allocation6], %s241
        // Predicated region
        $region37: #{tpu_custom_call.1} parent=31 // pred_check
          %p243 = pneg %p100
        $region38: #{tpu_custom_call.1} parent=31 // pred_check_branch
          %245 = sbr.rel (%p243) target = $region40
        $region39: #{tpu_custom_call.1} parent=31 // pred_region
          %246 = dma.done %s239, 256
        $region40: #{tpu_custom_call.1} parent=31 // pred_fallthru
          _
        %p247 = pneg %p70
        %p248 = pneg %p67
        %s249 = sand.u32 %s87, 1
        %s250 = scalar_lea.sflag [#allocation7], %s249
        %s251 = sand.u32 %s87, 1
        %s252 = smul.addr %s251, 16
        %s253 = scalar_lea.vmem [#allocation6], %s252
        %p254 = pneg %p100
        %p255 = pneg %p97
        %p256 = scmp.lt.s32.totalorder %s27, 2
        %s257 = scalar_select %p256, %s27, 2
        %p258 = scmp.lt.s32.totalorder %s29, 0
        %s259 = scalar_select %p258, %s29, 0
        %s260 = sadd.s32 %s259, %s257
        %s261 = scalar_lea.vmem %s2, %s260
        %p262 = pneg %p128
        %p263 = pneg %p125
        %p264 = pneg %p158
        %p265 = pneg %p155
        %s266 = sand.u32 %s145, 1
        %s267 = scalar_lea.sflag [#allocation5], %s266
        %s268 = sand.u32 %s145, 1
        %s269 = smul.addr %s268, 8
        %s270 = scalar_lea.vmem [#allocation8], %s269
        %s271 = smul.u32 2, %s28
        %s272 = smul.u32 4, %s30
        %p273 = scmp.lt.s32.totalorder %s27, 2
        %s274 = scalar_select %p273, %s27, 2
        %p275 = scmp.lt.s32.totalorder %s29, 0
        %s276 = scalar_select %p275, %s29, 0
        %s277 = sadd.s32 %s276, %s274
        %s278 = scalar_lea.vmem %s2, %s277
        %s279 = smul.u32 2, %s28
        %p281 = scmp.eq.s32.totalorder %s30, 0
        // Predicated region
        $region41: #{tpu_custom_call.1} parent=31 // pred_check
          %p282 = pneg %p281
        $region42: #{tpu_custom_call.1} parent=31 // pred_check_branch
          %284 = sbr.rel (%p282) target = $region44
        $region43: #{tpu_custom_call.1} parent=31 // pred_region
          %vm285 = vcmask 261120
          %286 = vst.msk [vmem:[#allocation2] sm:$0xff] %vm285, 0.0
          %287 = vst.msk [vmem:[#allocation2 + $0x8] sm:$0xff] %vm285, 0.0
        $region44: #{tpu_custom_call.1} parent=31 // pred_fallthru
          _
        %v288 = vld [vmem:[#allocation2] sm:$0xff]
        %v289 = vld [vmem:[#allocation2 + $0x8] sm:$0xff]
        %v290 = vld [vmem:[#allocation3] sm:$0xf]
        %v291 = vld [vmem:[#allocation3 + $0x4] sm:$0xf]
        %v292 = vld [vmem:[%s242] sm:$0xf]
        %v293 = vld [vmem:[%s242 + $0x4] sm:$0xf]
        %v294 = vld [vmem:[%s242 + $0x8] sm:$0xf]
        %v295 = vld [vmem:[%s242 + $0xc] sm:$0xf]
        %v298 = vunpack.c.l.b16 %v290
        %v299 = vunpack.c.l.b16 %v291
        %v300 = vpack.c.b16 %v299, %v298
        %v305 = vunpack.c.l.b16 %v292
        %v306 = vunpack.c.l.b16 %v293
        %v307 = vunpack.c.l.b16 %v294
        %v308 = vunpack.c.l.b16 %v295
        %v309 = vpack.c.b16 %v306, %v305
        %v310 = vpack.c.b16 %v308, %v307
        %vm313 = vcmask 261120
        %v315 = vsel %vm313, %v300, 0
        %317 = vmatprep.subr.bf16.mxu0 0
        %318 = vmatpush1.bf16.msra.mxu0 %v309
        %319 = vmatprep.subr.bf16.mxu0 0
        %320 = vmatpush1.bf16.msra.mxu0 %v310
        %321 = vmatprep.subr.bf16.mxu0 0
        %322 = vmatpush1.bf16.msra.mxu0 0
        %323 = vmatprep.subr.bf16.mxu0 0
        %324 = vmatpush1.bf16.msra.mxu0 0
        %325 = vmatprep.subr.bf16.mxu0 0
        %326 = vmatpush1.bf16.msra.mxu0 0
        %327 = vmatprep.subr.bf16.mxu0 0
        %328 = vmatpush1.bf16.msra.mxu0 0
        %329 = vmatprep.subr.bf16.mxu0 0
        %330 = vmatpush1.bf16.msra.mxu0 0
        %331 = vmatprep.subr.bf16.mxu0 0
        %332 = vmatpush1.bf16.msra.mxu0 0
        %333 = vmatprep.subr.bf16.mxu0 0
        %334 = vmatpush1.bf16.msra.mxu0 0
        %335 = vmatprep.subr.bf16.mxu0 0
        %336 = vmatpush1.bf16.msra.mxu0 0
        %337 = vmatprep.subr.bf16.mxu0 0
        %338 = vmatpush1.bf16.msra.mxu0 0
        %339 = vmatprep.subr.bf16.mxu0 0
        %340 = vmatpush1.bf16.msra.mxu0 0
        %341 = vmatprep.subr.bf16.mxu0 0
        %342 = vmatpush1.bf16.msra.mxu0 0
        %343 = vmatprep.subr.bf16.mxu0 0
        %344 = vmatpush1.bf16.msra.mxu0 0
        %345 = vmatprep.subr.bf16.mxu0 0
        %346 = vmatpush1.bf16.msra.mxu0 0
        %347 = vmatprep.subr.bf16.mxu0 0
        %348 = vmatpush1.bf16.msra.mxu0 0
        %349 = vmatprep.mubr.bf16.mxu0 0
        %350 = vmatmul.mubr.bf16.gmra.mrb[0].mxu0 %v315
        %v351 = vpop.f32.mrb[0].mxu0
        %v352 = vadd.f32 0.0, %v351
        %v353 = vpop.f32.mrb[0].mxu0
        %v354 = vpop.f32.mrb[0].mxu0
        %v355 = vadd.f32 0.0, %v354
        %v356 = vpop.f32.mrb[0].mxu0
        %357 = vdwg.mxu0
        %v358 = vadd.f32 %v288, %v352
        %v359 = vadd.f32 %v289, %v355
        %360 = vst.msk [vmem:[#allocation2] sm:$0xff] %vm313, %v358
        %361 = vst.msk [vmem:[#allocation2 + $0x8] sm:$0xff] %vm313, %v359
        // Predicated region
        $region45: #{tpu_custom_call.1} parent=31 // pred_check
          %p362 = pneg %p281
        $region46: #{tpu_custom_call.1} parent=31 // pred_check_branch
          %364 = sbr.rel (%p362) target = $region48
        $region47: #{tpu_custom_call.1} parent=31 // pred_region
          %v365 = vld [vmem:[#allocation2] sm:$0xff]
          %v366 = vld [vmem:[#allocation2 + $0x8] sm:$0xff]
          %v367 = vld [vmem:[%s278] sm:$0x1]
          %v369 = vlaneseq
          %v370 = vshrl.u32 %v369, 7
          %v371 = vsub.s32 0, %v370
          %v372 = vrot.slane %v367, %v371
          %v374 = vadd.f32 %v365, %v372
          %v375 = vadd.f32 %v366, %v372
          %v376 = vpack.c.bf16 %v375, %v374
          %v378 = vunpack.c.l.b16 %v376
          %v379 = vunpack.c.h.b16 %v376
          %v380 = vpack.c.b16 %v378, %v378
          %v381 = vpack.c.b16 %v379, %v379
          %vm384 = vcmask 257024
          %385 = vst.msk [vmem:[%s270] sm:$0xf] %vm384, %v380
          %386 = vst.msk [vmem:[%s270 + $0x4] sm:$0xf] %vm384, %v381
        $region48: #{tpu_custom_call.1} parent=31 // pred_fallthru
          _
        %s387 = sand.u32 %s145, 1
        %s388 = scalar_lea.sflag [#allocation5], %s387
        %s389 = sand.u32 %s145, 1
        %s390 = smul.addr %s389, 8
        %s391 = scalar_lea.vmem [#allocation8], %s390
        // Predicated region
        $region49: #{tpu_custom_call.1} parent=31 // pred_check
          %p392 = pneg %p155
        $region50: #{tpu_custom_call.1} parent=31 // pred_check_branch
          %394 = sbr.rel (%p392) target = $region52
        $region51: #{tpu_custom_call.1} parent=31 // pred_region
          %s395 = smul.u32 2, %s28
          %s397 = ssub.s32 128, 128
          %398 = vsyncadd %s388, %s397
          %s399 = sadd.s32 %s29, %s395
          %s400 = smul.addr %s27, 2
          %s401 = sadd.s32 %s399, %s400
          %s402 = smul.addr %s401, 64
          %s403 = scalar_lea.hbm %s3, %s402
          %s404 = sshll.u32 %s391, 4
          %s405 = int_to_ptr.vmem [resolvable:$true] %s404
          %410 = dma.vmem_to_hbm [thread:$0]  %s405, 128, %s403, %s388, 64, 64, 4
        $region52: #{tpu_custom_call.1} parent=31 // pred_fallthru
          _
      $region32: #{tpu_custom_call.1} parent=5 // pred_fallthru
        _
      %p411 = scmp.le.s32.totalorder 2, %s16
      // Predicated region
      $region53: #{tpu_custom_call.1} parent=5 // pred_check
        %p412 = pneg %p411
      $region54: #{tpu_custom_call.1} parent=5 // pred_check_branch
        %414 = sbr.rel (%p412) target = $region56
      $region55: #{tpu_custom_call.1} parent=5 // pred_region
        %s415 = ssub.s32 %s16, 2
        // Predicated region
        $region57: #{tpu_custom_call.1} parent=55 // pred_check
          %p416 = pneg %p161
        $region58: #{tpu_custom_call.1} parent=55 // pred_check_branch
          %418 = sbr.rel (%p416) target = $region60
        $region59: #{tpu_custom_call.1} parent=55 // pred_region
          %s419 = sand.u32 %s146, 1
          %s420 = scalar_lea.sflag [#allocation5], %s419
          %s421 = sand.u32 %s146, 1
          %s422 = smul.addr %s421, 8
          %s423 = scalar_lea.vmem [#allocation8], %s422
          %424 = dma.done %s420, 128
        $region60: #{tpu_custom_call.1} parent=55 // pred_fallthru
          _
      $region56: #{tpu_custom_call.1} parent=5 // pred_fallthru
        _
    $region6: #{tpu_custom_call.1} parent=1 // loop_footer
      %s20 = sadd.s32 1, %s16
    $region7: #{tpu_custom_call.1} parent=1 // loop_footer_branch
      %15 = sbr.rel target = $region3
    $region8: #{tpu_custom_call.1} parent=1 // loop_exit
      _
    %425 = vsyncpa [#allocation4], 1
    %s426 = scalar_lea.sflag [#allocation4], 1
    %427 = vsyncpa %s426, 1
    %428 = vsyncpa [#allocation7], 1
    %s429 = scalar_lea.sflag [#allocation7], 1
    %430 = vsyncpa %s429, 1
    %431 = vsyncpa [#allocation5], 1
    %s432 = scalar_lea.sflag [#allocation5], 1
    %433 = vsyncpa %s432, 1

</llo_original>
